<compile_context>
chip_gen: v7x
topology: tpu7x:2x2x1
jax: 0.10.0
libtpu: 0.0.40
codegen_flags: <defaults>
</compile_context>

<pallas_src>
import jax
import jax.numpy as jnp
import numpy as np
from jax.experimental import pallas as pl
from jax.experimental.pallas import tpu as pltpu


def _make_moving_avg_kernel(seq_len, channels, kernel_size, stride, pad, out_len):
    """Builds a kernel operating on one batch element: x_ref [L, C] -> o_ref [L_out, C]."""

    def kernel(x_ref, o_ref):
        x = x_ref[...].astype(jnp.float32)                              # [L, C]
        if pad > 0:
            front = jnp.broadcast_to(x[0:1, :], (pad, channels))        # edge-replicate
            end = jnp.broadcast_to(x[seq_len - 1:seq_len, :], (pad, channels))
            xp = jnp.concatenate([front, x, end], axis=0)               # [L + 2*pad, C]
        else:
            xp = x

        acc = jnp.zeros((out_len, channels), jnp.float32)
        for j in range(kernel_size):                                    # static unroll (k small)
            stop = j + (out_len - 1) * stride + 1
            win = xp[j:stop, :] if stride == 1 else xp[j:stop:stride, :]
            acc = acc + win
        o_ref[...] = (acc * (1.0 / kernel_size)).astype(o_ref.dtype)

    return kernel


def moving_avg(x, kernel_size, stride):
    """Pallas equivalent of moving_avg.forward; x is [batch, seq_len, channels]."""
    batch, seq_len, channels = x.shape
    pad = (kernel_size - 1) // 2
    out_len = (seq_len + 2 * pad - kernel_size) // stride + 1
    kernel = _make_moving_avg_kernel(seq_len, channels, kernel_size, stride, pad, out_len)
    return pl.pallas_call(
        kernel,
        out_shape=jax.ShapeDtypeStruct((batch, out_len, channels), x.dtype),
        grid=(batch,),
        in_specs=[pl.BlockSpec((None, seq_len, channels), lambda b: (b, 0, 0))],
        out_specs=pl.BlockSpec((None, out_len, channels), lambda b: (b, 0, 0)),
        compiler_params=pltpu.CompilerParams(dimension_semantics=("parallel",)),
    )(x)


def _reference(x, kernel_size, stride):
    """Pure-JAX reference matching the PyTorch module (same op order as the kernel)."""
    b, l, c = x.shape
    pad = (kernel_size - 1) // 2
    front = jnp.broadcast_to(x[:, 0:1, :], (b, pad, c))
    end = jnp.broadcast_to(x[:, l - 1:l, :], (b, pad, c))
    xp = jnp.concatenate([front, x, end], axis=1)
    out_len = (xp.shape[1] - kernel_size) // stride + 1
    acc = jnp.zeros((b, out_len, c), jnp.float32)
    for j in range(kernel_size):
        stop = j + (out_len - 1) * stride + 1
        acc = acc + xp[:, j:stop:stride, :].astype(jnp.float32)
    return (acc * (1.0 / kernel_size)).astype(x.dtype)


if __name__ == "__main__":
    B, L, C = 2, 16, 128          # batch, seq_len, channels (channels -> lane dim)
    KERNEL_SIZE, STRIDE = 5, 1    # moving_avg(kernel_size=5, stride=1)

    key = jax.random.PRNGKey(0)
    x = jax.random.normal(key, (B, L, C), jnp.float32)

    out = moving_avg(x, KERNEL_SIZE, STRIDE)
    jax.block_until_ready(out)

    ref = _reference(x, KERNEL_SIZE, STRIDE)
    expected_len = (L + 2 * ((KERNEL_SIZE - 1) // 2) - KERNEL_SIZE) // STRIDE + 1
    assert out.shape == (B, expected_len, C)
    np.testing.assert_allclose(np.asarray(out), np.asarray(ref), rtol=1e-5, atol=1e-5)
    print("KERNEL_OK")
</pallas_src>

<mosaic_0001>
module attributes {stable_mosaic.version = 11 : i64} {
  func.func @kernel(%arg0: i32, %arg1: memref<1x16x128xf32, #tpu.memory_space<vmem>>, %arg2: memref<1x16x128xf32, #tpu.memory_space<vmem>>) attributes {dimension_semantics = [#tpu.dimension_semantics<parallel>], iteration_bounds = array<i64: 2>, scalar_prefetch = 0 : i64, scratch_operands = 0 : i64, tpu.core_type = #tpu.core_type<tc>, window_params = [{transform_indices = @transform_0, window_bounds = array<i64: 1, 16, 128>}, {transform_indices = @transform_1, window_bounds = array<i64: 1, 16, 128>}]} {
    %c0 = arith.constant 0 : index
    %c0_0 = arith.constant 0 : index
    %c0_1 = arith.constant 0 : index
    %0 = vector.load %arg1[%c0, %c0_0, %c0_1] : memref<1x16x128xf32, #tpu.memory_space<vmem>>, vector<1x16x128xf32>
    %1 = vector.shape_cast %0 : vector<1x16x128xf32> to vector<16x128xf32>
    %2 = vector.extract_strided_slice %1 {offsets = [0, 0], sizes = [1, 128], strides = [1, 1]} : vector<16x128xf32> to vector<1x128xf32>
    %3 = vector.shape_cast %2 : vector<1x128xf32> to vector<1x128xf32>
    %4 = vector.broadcast %3 : vector<1x128xf32> to vector<2x128xf32>
    %5 = vector.extract_strided_slice %1 {offsets = [15, 0], sizes = [1, 128], strides = [1, 1]} : vector<16x128xf32> to vector<1x128xf32>
    %6 = vector.shape_cast %5 : vector<1x128xf32> to vector<1x128xf32>
    %7 = vector.broadcast %6 : vector<1x128xf32> to vector<2x128xf32>
    %8 = tpu.concatenate %4, %1, %7 in 0 : vector<2x128xf32>, vector<16x128xf32>, vector<2x128xf32> -> vector<20x128xf32>
    %cst = arith.constant 0.000000e+00 : f32
    %9 = vector.broadcast %cst : f32 to vector<16x128xf32>
    %10 = vector.extract_strided_slice %8 {offsets = [0, 0], sizes = [16, 128], strides = [1, 1]} : vector<20x128xf32> to vector<16x128xf32>
    %11 = arith.addf %9, %10 : vector<16x128xf32>
    %12 = vector.extract_strided_slice %8 {offsets = [1, 0], sizes = [16, 128], strides = [1, 1]} : vector<20x128xf32> to vector<16x128xf32>
    %13 = arith.addf %11, %12 : vector<16x128xf32>
    %14 = vector.extract_strided_slice %8 {offsets = [2, 0], sizes = [16, 128], strides = [1, 1]} : vector<20x128xf32> to vector<16x128xf32>
    %15 = arith.addf %13, %14 : vector<16x128xf32>
    %16 = vector.extract_strided_slice %8 {offsets = [3, 0], sizes = [16, 128], strides = [1, 1]} : vector<20x128xf32> to vector<16x128xf32>
    %17 = arith.addf %15, %16 : vector<16x128xf32>
    %18 = vector.extract_strided_slice %8 {offsets = [4, 0], sizes = [16, 128], strides = [1, 1]} : vector<20x128xf32> to vector<16x128xf32>
    %19 = arith.addf %17, %18 : vector<16x128xf32>
    %cst_2 = arith.constant 2.000000e-01 : f32
    %20 = vector.broadcast %cst_2 : f32 to vector<16x128xf32>
    %21 = arith.mulf %19, %20 : vector<16x128xf32>
    %c0_3 = arith.constant 0 : index
    %c0_4 = arith.constant 0 : index
    %c0_5 = arith.constant 0 : index
    %22 = vector.load %arg2[%c0_3, %c0_4, %c0_5] : memref<1x16x128xf32, #tpu.memory_space<vmem>>, vector<1x16x128xf32>
    %23 = vector.shape_cast %22 : vector<1x16x128xf32> to vector<16x128xf32>
    %24 = vector.shape_cast %21 : vector<16x128xf32> to vector<1x16x128xf32>
    tpu.vector_store %arg2[%c0_3, %c0_4, %c0_5], %24 {strides = array<i32>} : memref<1x16x128xf32, #tpu.memory_space<vmem>>, vector<1x16x128xf32>,
    return
  }
  func.func @transform_0(%arg0: i32) -> (i32, i32, i32) {
    %c0_i32 = arith.constant 0 : i32
    %c0_i32_0 = arith.constant 0 : i32
    %c0_i32_1 = arith.constant 0 : i32
    return %arg0, %c0_i32, %c0_i32_0 : i32, i32, i32
  }
  func.func @transform_1(%arg0: i32) -> (i32, i32, i32) {
    %c0_i32 = arith.constant 0 : i32
    %c0_i32_0 = arith.constant 0 : i32
    %c0_i32_1 = arith.constant 0 : i32
    return %arg0, %c0_i32, %c0_i32_0 : i32, i32, i32
  }
}

</mosaic_0001>

<llo_original>
// kernel: tpu_custom_call.1
$region0: #{tpu_custom_call.1}
  #allocation0 [shape = 'u32[]', space=smem, size = 0x4, offset = 0x4, fixed_abs, tag = 'smem constant byte address 0x4 - core index']
  #allocation1 [shape = 'u32[144,128]{1,0:T(1,128)}', space=vmem, size = 0x12000, scoped, tag = 'internal scratch']
  %s0 = inlined_call_operand.hbm [shape: f32[2,16,128], index: 0, kind: input, shape index: {}]
  %s1 = inlined_call_operand.hbm [shape: f32[2,16,128], index: 1, kind: output, shape index: {}]
  %s2 = sld [smem:[#allocation0]]
  $region41: #{tpu_custom_call.1} parent=0
    _
  %s4 = ssub.s32 1, %s2
  %s5 = scalar_select 0, %s4, %s2
  $region1: #{tpu_custom_call.1} parent=0
    #allocation2 [shape = 'u8[16384]{0}', space=vmem, size = 0x4000, scoped, tag = 'input window, operand 0']
    #allocation3 [shape = 's32[2]{0}', space=sflag, size = 0x8, scoped, tag = 'scoped memory for tpu_custom_call.1']
    #allocation4 [shape = 's32[2]{0}', space=sflag, size = 0x8, scoped, tag = 'scoped memory for tpu_custom_call.1']
    #allocation5 [shape = 'u8[16384]{0}', space=vmem, size = 0x4000, scoped, tag = 'output window, operand 0']
    %6 = vsyncpa [#allocation3], 0
    %s7 = scalar_lea.sflag [#allocation3], 1
    %8 = vsyncpa %s7, 0
    %9 = vsyncpa [#allocation4], 0
    %s10 = scalar_lea.sflag [#allocation4], 1
    %11 = vsyncpa %s10, 0
    loop: start=0, step=1, limit=4
    $region2: #{tpu_custom_call.1} parent=1 // loop_pre_header
      _
    $region3: #{tpu_custom_call.1} parent=1 // loop_header
      %s13 = sphi 0, %s17
      %p14 = scmp.ge.s32.totalorder %s13, 4
      %s23 = sphi 0, %s25
      %s26 = sphi 0, %s23
      %s27 = sphi 0, %s26
      %s43 = sphi 0, %s27
      %s49 = sphi 0, %s51
      %s52 = sphi 0, %s49
      %s53 = sphi 0, %s52
      %s69 = sphi 0, %s53
    $region4: #{tpu_custom_call.1} parent=1 // loop_header_branch
      %16 = sbr.rel (%p14) target = $region8
    $region5: #{tpu_custom_call.1} parent=1 // loop_body
      %s18 = ssub.s32 %s13, 1
      %s19 = ssub.s32 %s13, 2
      %s20 = sadd.s32 %s13, 1
      %s21 = ssub.s32 %s13, %s20
      %p22 = scmp.eq.s32.totalorder %s21, 0
      %s24 = sadd.s32 %s23, 1
      %s25 = scalar_select %p22, %s23, %s24
      %p28 = pneg %p22
      %p29 = scmp.eq.s32.totalorder %s13, 1
      %p30 = por %p28, %p29
      %p31 = scmp.ne.s32.totalorder %s23, %s26
      %p32 = scmp.eq.s32.totalorder %s13, 0
      %p33 = por %p31, %p32
      %p34 = scmp.ne.s32.totalorder %s23, %s26
      %p35 = scmp.eq.s32.totalorder %s18, 1
      %p36 = por %p34, %p35
      %p37 = scmp.ne.s32.totalorder %s26, %s27
      %p38 = scmp.eq.s32.totalorder %s18, 0
      %p39 = por %p37, %p38
      %p40 = scmp.ne.s32.totalorder %s26, %s27
      %p41 = scmp.eq.s32.totalorder %s19, 1
      %p42 = por %p40, %p41
      %p44 = scmp.ne.s32.totalorder %s27, %s43
      %p45 = scmp.eq.s32.totalorder %s19, 0
      %p46 = por %p44, %p45
      %s47 = ssub.s32 %s13, %s20
      %p48 = scmp.eq.s32.totalorder %s47, 0
      %s50 = sadd.s32 %s49, 1
      %s51 = scalar_select %p48, %s49, %s50
      %p54 = pneg %p48
      %p55 = scmp.eq.s32.totalorder %s13, 1
      %p56 = por %p54, %p55
      %p57 = scmp.ne.s32.totalorder %s49, %s52
      %p58 = scmp.eq.s32.totalorder %s13, 0
      %p59 = por %p57, %p58
      %p60 = scmp.ne.s32.totalorder %s49, %s52
      %p61 = scmp.eq.s32.totalorder %s18, 1
      %p62 = por %p60, %p61
      %p63 = scmp.ne.s32.totalorder %s52, %s53
      %p64 = scmp.eq.s32.totalorder %s18, 0
      %p65 = por %p63, %p64
      %p66 = scmp.ne.s32.totalorder %s52, %s53
      %p67 = scmp.eq.s32.totalorder %s19, 1
      %p68 = por %p66, %p67
      %p70 = scmp.ne.s32.totalorder %s53, %s69
      %p71 = scmp.eq.s32.totalorder %s19, 0
      %p72 = por %p70, %p71
      %p73 = scmp.le.s32.totalorder 1, %s13
      %p74 = scmp.lt.s32.totalorder %s13, 3
      %p75 = pnand %p73, %p74
      %p76 = pneg %p75
      // Predicated region
      $region9: #{tpu_custom_call.1} parent=5 // pred_check
        _
      $region10: #{tpu_custom_call.1} parent=5 // pred_check_branch
        %78 = sbr.rel (%p75) target = $region12
      $region11: #{tpu_custom_call.1} parent=5 // pred_region
        %s79 = ssub.s32 %s13, 1
      $region12: #{tpu_custom_call.1} parent=5 // pred_fallthru
        _
      %p80 = scmp.lt.s32.totalorder %s13, 2
      // Predicated region
      $region13: #{tpu_custom_call.1} parent=5 // pred_check
        %p81 = pneg %p80
      $region14: #{tpu_custom_call.1} parent=5 // pred_check_branch
        %83 = sbr.rel (%p81) target = $region16
      $region15: #{tpu_custom_call.1} parent=5 // pred_region
        // Predicated region
        $region17: #{tpu_custom_call.1} parent=15 // pred_check
          %p84 = pneg %p33
        $region18: #{tpu_custom_call.1} parent=15 // pred_check_branch
          %86 = sbr.rel (%p84) target = $region20
        $region19: #{tpu_custom_call.1} parent=15 // pred_region
          %s87 = sand.u32 %s23, 1
          %s88 = scalar_lea.sflag [#allocation3], %s87
          %s89 = sand.u32 %s23, 1
          %s90 = smul.addr %s89, 16
          %s91 = scalar_lea.vmem [#allocation2], %s90
          %s93 = ssub.s32 256, 256
          %94 = vsyncadd %s88, %s93
          %s95 = smul.addr %s13, 2
          %s96 = smul.addr %s95, 128
          %s97 = scalar_lea.hbm %s0, %s96
          %s98 = sshll.u32 %s91, 4
          %s99 = int_to_ptr.vmem [resolvable:$true] %s98
          %104 = dma.hbm_to_vmem [thread:$0]  %s97, 256, %s99, %s88, 128, 128, 8
        $region20: #{tpu_custom_call.1} parent=15 // pred_fallthru
          _
      $region16: #{tpu_custom_call.1} parent=5 // pred_fallthru
        _
      %p105 = scmp.le.s32.totalorder 1, %s13
      %p106 = scmp.lt.s32.totalorder %s13, 3
      %p107 = pnand %p105, %p106
      %p108 = pneg %p107
      // Predicated region
      $region21: #{tpu_custom_call.1} parent=5 // pred_check
        _
      $region22: #{tpu_custom_call.1} parent=5 // pred_check_branch
        %110 = sbr.rel (%p107) target = $region24
      $region23: #{tpu_custom_call.1} parent=5 // pred_region
        %s111 = ssub.s32 %s13, 1
        %s112 = sand.u32 %s26, 1
        %s113 = scalar_lea.sflag [#allocation3], %s112
        %s114 = sand.u32 %s26, 1
        %s115 = smul.addr %s114, 16
        %s116 = scalar_lea.vmem [#allocation2], %s115
        // Predicated region
        $region25: #{tpu_custom_call.1} parent=23 // pred_check
          %p117 = pneg %p39
        $region26: #{tpu_custom_call.1} parent=23 // pred_check_branch
          %119 = sbr.rel (%p117) target = $region28
        $region27: #{tpu_custom_call.1} parent=23 // pred_region
          %120 = dma.done %s113, 256
        $region28: #{tpu_custom_call.1} parent=23 // pred_fallthru
          _
        %s121 = sand.u32 %s26, 1
        %s122 = scalar_lea.sflag [#allocation3], %s121
        %s123 = sand.u32 %s26, 1
        %s124 = smul.addr %s123, 16
        %s125 = scalar_lea.vmem [#allocation2], %s124
        %p126 = pneg %p39
        %p127 = pneg %p36
        %p128 = pneg %p65
        %p129 = pneg %p62
        %s130 = sand.u32 %s52, 1
        %s131 = scalar_lea.sflag [#allocation4], %s130
        %s132 = sand.u32 %s52, 1
        %s133 = smul.addr %s132, 16
        %s134 = scalar_lea.vmem [#allocation5], %s133
        %v135 = vld [vmem:[%s116] sm:$0xff]
        %v136 = vld [vmem:[%s116 + $0x8] sm:$0xff]
        %v137 = vlaneseq
        %v138 = vshrl.u32 %v137, 7
        %v139 = vsub.s32 0, %v138
        %v140 = vrot.slane %v135, %v139
        %v141 = vlaneseq
        %v142 = vshrl.u32 %v141, 7
        %v143 = vsub.s32 7, %v142
        %v144 = vrot.slane %v136, %v143
        %vm147 = vcmask 1041408
        %v148 = vrot.slane %v135, 6
        %v149 = vrot.slane %v136, 6
        %v150 = vsel %vm147, %v148, %v149
        %v154 = vsel %vm147, %v140, %v148
        %v155 = vsel %vm147, %v149, %v144
        %v156 = vadd.f32 %v154, 0.0
        %v157 = vadd.f32 %v150, 0.0
        %vm160 = vcmask 1046528
        %v161 = vrot.slane %v154, 1
        %v162 = vrot.slane %v150, 1
        %v163 = vsel %vm160, %v161, %v162
        %v164 = vrot.slane %v155, 1
        %v165 = vsel %vm160, %v162, %v164
        %v168 = vadd.f32 %v156, %v163
        %v169 = vadd.f32 %v157, %v165
        %vm170 = vcmask 1045504
        %v171 = vrot.slane %v154, 2
        %v172 = vrot.slane %v150, 2
        %v173 = vsel %vm170, %v171, %v172
        %v174 = vrot.slane %v155, 2
        %v175 = vsel %vm170, %v172, %v174
        %v178 = vadd.f32 %v168, %v173
        %v179 = vadd.f32 %v169, %v175
        %vm180 = vcmask 1044480
        %v181 = vrot.slane %v154, 3
        %v182 = vrot.slane %v150, 3
        %v183 = vsel %vm180, %v181, %v182
        %v184 = vrot.slane %v155, 3
        %v185 = vsel %vm180, %v182, %v184
        %v188 = vadd.f32 %v178, %v183
        %v189 = vadd.f32 %v179, %v185
        %vm190 = vcmask 1043456
        %v191 = vrot.slane %v154, 4
        %v192 = vrot.slane %v150, 4
        %v193 = vsel %vm190, %v191, %v192
        %v194 = vrot.slane %v155, 4
        %v195 = vsel %vm190, %v192, %v194
        %v198 = vadd.f32 %v188, %v193
        %v199 = vadd.f32 %v189, %v195
        %v200 = vmul.f32 %v198, 0.2
        %v201 = vmul.f32 %v199, 0.2
        %202 = vst [vmem:[%s134] sm:$0xff] %v200
        %203 = vst [vmem:[%s134 + $0x8] sm:$0xff] %v201
        %s204 = sand.u32 %s52, 1
        %s205 = scalar_lea.sflag [#allocation4], %s204
        %s206 = sand.u32 %s52, 1
        %s207 = smul.addr %s206, 16
        %s208 = scalar_lea.vmem [#allocation5], %s207
        // Predicated region
        $region29: #{tpu_custom_call.1} parent=23 // pred_check
          %p209 = pneg %p62
        $region30: #{tpu_custom_call.1} parent=23 // pred_check_branch
          %211 = sbr.rel (%p209) target = $region32
        $region31: #{tpu_custom_call.1} parent=23 // pred_region
          %s213 = ssub.s32 256, 256
          %214 = vsyncadd %s205, %s213
          %s215 = smul.addr %s18, 2
          %s216 = smul.addr %s215, 128
          %s217 = scalar_lea.hbm %s1, %s216
          %s218 = sshll.u32 %s208, 4
          %s219 = int_to_ptr.vmem [resolvable:$true] %s218
          %224 = dma.vmem_to_hbm [thread:$0]  %s219, 256, %s217, %s205, 128, 128, 8
        $region32: #{tpu_custom_call.1} parent=23 // pred_fallthru
          _
      $region24: #{tpu_custom_call.1} parent=5 // pred_fallthru
        _
      %p225 = scmp.le.s32.totalorder 2, %s13
      // Predicated region
      $region33: #{tpu_custom_call.1} parent=5 // pred_check
        %p226 = pneg %p225
      $region34: #{tpu_custom_call.1} parent=5 // pred_check_branch
        %228 = sbr.rel (%p226) target = $region36
      $region35: #{tpu_custom_call.1} parent=5 // pred_region
        %s229 = ssub.s32 %s13, 2
        // Predicated region
        $region37: #{tpu_custom_call.1} parent=35 // pred_check
          %p230 = pneg %p68
        $region38: #{tpu_custom_call.1} parent=35 // pred_check_branch
          %232 = sbr.rel (%p230) target = $region40
        $region39: #{tpu_custom_call.1} parent=35 // pred_region
          %s233 = sand.u32 %s53, 1
          %s234 = scalar_lea.sflag [#allocation4], %s233
          %s235 = sand.u32 %s53, 1
          %s236 = smul.addr %s235, 16
          %s237 = scalar_lea.vmem [#allocation5], %s236
          %238 = dma.done %s234, 256
        $region40: #{tpu_custom_call.1} parent=35 // pred_fallthru
          _
      $region36: #{tpu_custom_call.1} parent=5 // pred_fallthru
        _
    $region6: #{tpu_custom_call.1} parent=1 // loop_footer
      %s17 = sadd.s32 1, %s13
    $region7: #{tpu_custom_call.1} parent=1 // loop_footer_branch
      %12 = sbr.rel target = $region3
    $region8: #{tpu_custom_call.1} parent=1 // loop_exit
      _
    %239 = vsyncpa [#allocation3], 1
    %s240 = scalar_lea.sflag [#allocation3], 1
    %241 = vsyncpa %s240, 1
    %242 = vsyncpa [#allocation4], 1
    %s243 = scalar_lea.sflag [#allocation4], 1
    %244 = vsyncpa %s243, 1

</llo_original>
